<compile_context>
chip_gen: v5e
topology: v5e:2x2
jax: 0.10.0
libtpu: 0.0.40
codegen_flags: <defaults>
</compile_context>

<pallas_src>
import jax
import jax.numpy as jnp
from jax.experimental import pallas as pl
from jax.experimental.pallas import tpu as pltpu

# Largest batch handled as a single grid step.  Above this the batch is split
# into >= 2 tiles so v7x's two TensorCores can both stream HBM.
SINGLE_TILE_MAX = 1024
MAX_TB = 8192  # 8192 rows * (2 in + 4 out) * 4 B, double-buffered ≈ 0.4 MiB VMEM


def linear_add_kernel(x_ref, w_ref, c_ref, o_ref):
    # x_ref: (tb, K=2) ; w_ref: (K, 4) ; c_ref: (1, 4) ; o_ref: (tb, 4)
    x = x_ref[...]
    w = w_ref[...]
    k = x.shape[1]  # static == in_features == 2
    # K-term contraction as VPU broadcast-FMAs instead of an MXU matmul.
    acc = x[:, 0:1] * w[0:1, :]
    for j in range(1, k):
        acc = acc + x[:, j:j + 1] * w[j:j + 1, :]
    o_ref[...] = acc + c_ref[...]


def prepare_params(weight, bias, other):
    """One-time host-side parameter prep (hoisted out of the per-call path).

    weight: [out_f, in_f] (torch layout) -> returns W^T [in_f, out_f]
    bias, other: [out_f]                 -> folded constant row [1, out_f]
    NOTE: assumes `other` is a per-feature vector (as in the module's default);
    a batched [B, out_f] `other` would need to become a tiled kernel input.
    """
    w_t = jnp.asarray(weight, jnp.float32).T
    c = (jnp.asarray(bias, jnp.float32) + jnp.asarray(other, jnp.float32))
    return w_t, c.reshape(1, -1)


def _choose_tb(B):
    if B <= SINGLE_TILE_MAX:
        return B                       # single tile; block dim == full array dim
    half = pl.cdiv(B, 2)               # keep grid >= 2 so v7x uses both TCs
    tb = pl.cdiv(half, 8) * 8          # multiple of 8 sublanes
    return min(MAX_TB, tb)


def model_forward(x, w_t, c):
    """Equivalent of torch: Linear(2, 4)(x) + other, with params pre-folded.

    x:   [B, in_f]       float32
    w_t: [in_f, out_f]   float32 (pre-transposed weight)
    c:   [1, out_f]      float32 (bias + other)
    returns [B, out_f]   float32
    """
    B, in_f = x.shape
    out_f = w_t.shape[1]
    tb = _choose_tb(B)
    grid = (pl.cdiv(B, tb),)

    return pl.pallas_call(
        linear_add_kernel,
        out_shape=jax.ShapeDtypeStruct((B, out_f), jnp.float32),
        grid=grid,
        in_specs=[
            pl.BlockSpec((tb, in_f), lambda i: (i, 0)),     # x: batch-tiled
            pl.BlockSpec((in_f, out_f), lambda i: (0, 0)),  # W^T: resident
            pl.BlockSpec((1, out_f), lambda i: (0, 0)),     # bias + other
        ],
        out_specs=pl.BlockSpec((tb, out_f), lambda i: (i, 0)),
        compiler_params=pltpu.CompilerParams(
            dimension_semantics=("parallel",)),
    )(x, w_t, c)


if __name__ == "__main__":
    key = jax.random.PRNGKey(0)
    kx, kw, kb, kx2, kx3 = jax.random.split(key, 5)

    in_f, out_f = 2, 4
    bound = 1.0 / (in_f ** 0.5)
    weight = jax.random.uniform(kw, (out_f, in_f), jnp.float32, -bound, bound)
    bias = jax.random.uniform(kb, (out_f,), jnp.float32, -bound, bound)
    other = jnp.array([2.1, 3.1, 4.1, 5.1], dtype=jnp.float32)

    # Hoisted constant prep (done once, not per forward call).
    w_t, c = prepare_params(weight, bias, other)

    # Module-spec input: x2 = torch.randn(1, 2)
    x2 = jax.random.normal(kx, (1, 2), dtype=jnp.float32)
    out = jax.block_until_ready(model_forward(x2, w_t, c))
    ref = x2 @ weight.T + bias + other
    assert out.shape == (1, out_f)
    assert jnp.allclose(out, ref, atol=1e-5), (out, ref)

    # Single-tile batched path.
    xb = jax.random.normal(kx2, (64, 2), dtype=jnp.float32)
    outb = jax.block_until_ready(model_forward(xb, w_t, c))
    refb = xb @ weight.T + bias + other
    assert outb.shape == (64, out_f)
    assert jnp.allclose(outb, refb, atol=1e-5)

    # Multi-tile path (grid >= 2) with a non-divisible last block (overhang
    # writes dropped by Pallas, over-read rows never feed in-range outputs).
    xc = jax.random.normal(kx3, (2600, 2), dtype=jnp.float32)
    outc = jax.block_until_ready(model_forward(xc, w_t, c))
    refc = xc @ weight.T + bias + other
    assert outc.shape == (2600, out_f)
    assert jnp.allclose(outc, refc, atol=1e-5)

    print("KERNEL_OK")
</pallas_src>

<mosaic_0001>
module attributes {stable_mosaic.version = 11 : i64} {
  func.func @linear_add_kernel(%arg0: i32, %arg1: memref<1x2xf32, #tpu.memory_space<vmem>>, %arg2: memref<2x4xf32, #tpu.memory_space<vmem>>, %arg3: memref<1x4xf32, #tpu.memory_space<vmem>>, %arg4: memref<1x4xf32, #tpu.memory_space<vmem>>) attributes {dimension_semantics = [#tpu.dimension_semantics<parallel>], iteration_bounds = array<i64: 1>, scalar_prefetch = 0 : i64, scratch_operands = 0 : i64, tpu.core_type = #tpu.core_type<tc>, window_params = [{transform_indices = @transform_0, window_bounds = array<i64: 1, 2>}, {pipeline_mode = #tpu.pipeline_mode<synchronous>, transform_indices = @transform_1, window_bounds = array<i64: 2, 4>}, {pipeline_mode = #tpu.pipeline_mode<synchronous>, transform_indices = @transform_2, window_bounds = array<i64: 1, 4>}, {transform_indices = @transform_3, window_bounds = array<i64: 1, 4>}]} {
    %c0 = arith.constant 0 : index
    %c0_0 = arith.constant 0 : index
    %0 = vector.load %arg1[%c0, %c0_0] : memref<1x2xf32, #tpu.memory_space<vmem>>, vector<1x2xf32>
    %c0_1 = arith.constant 0 : index
    %c0_2 = arith.constant 0 : index
    %1 = vector.load %arg2[%c0_1, %c0_2] : memref<2x4xf32, #tpu.memory_space<vmem>>, vector<2x4xf32>
    %2 = vector.extract_strided_slice %0 {offsets = [0, 0], sizes = [1, 1], strides = [1, 1]} : vector<1x2xf32> to vector<1x1xf32>
    %3 = vector.extract_strided_slice %1 {offsets = [0, 0], sizes = [1, 4], strides = [1, 1]} : vector<2x4xf32> to vector<1x4xf32>
    %4 = vector.broadcast %2 : vector<1x1xf32> to vector<1x4xf32>
    %5 = arith.mulf %4, %3 : vector<1x4xf32>
    %6 = vector.extract_strided_slice %0 {offsets = [0, 1], sizes = [1, 1], strides = [1, 1]} : vector<1x2xf32> to vector<1x1xf32>
    %7 = vector.extract_strided_slice %1 {offsets = [1, 0], sizes = [1, 4], strides = [1, 1]} : vector<2x4xf32> to vector<1x4xf32>
    %8 = vector.broadcast %6 : vector<1x1xf32> to vector<1x4xf32>
    %9 = arith.mulf %8, %7 : vector<1x4xf32>
    %10 = arith.addf %5, %9 : vector<1x4xf32>
    %c0_3 = arith.constant 0 : index
    %c0_4 = arith.constant 0 : index
    %11 = vector.load %arg3[%c0_3, %c0_4] : memref<1x4xf32, #tpu.memory_space<vmem>>, vector<1x4xf32>
    %12 = arith.addf %10, %11 : vector<1x4xf32>
    %c0_5 = arith.constant 0 : index
    %c0_6 = arith.constant 0 : index
    %13 = vector.load %arg4[%c0_5, %c0_6] : memref<1x4xf32, #tpu.memory_space<vmem>>, vector<1x4xf32>
    tpu.vector_store %arg4[%c0_5, %c0_6], %12 {strides = array<i32>} : memref<1x4xf32, #tpu.memory_space<vmem>>, vector<1x4xf32>,
    return
  }
  func.func @transform_0(%arg0: i32) -> (i32, i32) {
    %c0_i32 = arith.constant 0 : i32
    %c0_i32_0 = arith.constant 0 : i32
    return %arg0, %c0_i32 : i32, i32
  }
  func.func @transform_1(%arg0: i32) -> (i32, i32) {
    %c0_i32 = arith.constant 0 : i32
    %c0_i32_0 = arith.constant 0 : i32
    %c0_i32_1 = arith.constant 0 : i32
    return %c0_i32, %c0_i32_0 : i32, i32
  }
  func.func @transform_2(%arg0: i32) -> (i32, i32) {
    %c0_i32 = arith.constant 0 : i32
    %c0_i32_0 = arith.constant 0 : i32
    %c0_i32_1 = arith.constant 0 : i32
    return %c0_i32, %c0_i32_0 : i32, i32
  }
  func.func @transform_3(%arg0: i32) -> (i32, i32) {
    %c0_i32 = arith.constant 0 : i32
    %c0_i32_0 = arith.constant 0 : i32
    return %arg0, %c0_i32 : i32, i32
  }
}

</mosaic_0001>

<llo_original>
// kernel: tpu_custom_call.1
$region0: #{tpu_custom_call.1}
  #allocation0 [shape = 'u32[]', space=smem, size = 0x4, offset = 0x4, fixed_abs, tag = 'smem constant byte address 0x4 - core index']
  #allocation1 [shape = 'u32[72,128]{1,0:T(1,128)}', space=vmem, size = 0x9000, scoped, tag = 'internal scratch']
  %s0 = inlined_call_operand.hbm [shape: f32[1,2], index: 0, kind: input, shape index: {}]
  %s1 = inlined_call_operand.hbm [shape: f32[2,4], index: 1, kind: input, shape index: {}]
  %s2 = inlined_call_operand.vmem [shape: f32[1,4], index: 2, kind: input, shape index: {}]
  %s3 = inlined_call_operand.hbm [shape: f32[1,4], index: 3, kind: output, shape index: {}]
  %s4 = sld [smem:[#allocation0]]
  $region30: #{tpu_custom_call.1} parent=0
    _
  %s6 = ssub.s32 1, %s4
  %s7 = scalar_select 0, %s6, %s4
  $region1: #{tpu_custom_call.1} parent=0
    #allocation2 [shape = 'u8[512]{0}', space=vmem, size = 0x400, scoped, tag = 'input window, operand 0, single buffered']
    #allocation3 [shape = 's32[1]{0}', space=sflag, size = 0x4, scoped, tag = 'scoped memory for tpu_custom_call.1']
    #allocation4 [shape = 's32[1]{0}', space=sflag, size = 0x4, scoped, tag = 'scoped memory for tpu_custom_call.1']
    #allocation5 [shape = 'u8[1024]{0}', space=vmem, size = 0x400, scoped, tag = 'input window, operand 1, single buffered']
    #allocation6 [shape = 's32[1]{0}', space=sflag, size = 0x4, scoped, tag = 'scoped memory for tpu_custom_call.1']
    #allocation7 [shape = 'u8[512]{0}', space=vmem, size = 0x400, scoped, tag = 'output window, operand 0, single buffered']
    %8 = vsyncpa [#allocation3], 0
    %9 = vsyncpa [#allocation6], 0
    %10 = vsyncpa [#allocation4], 0
    // Predicated region
    $region2: #{tpu_custom_call.1} parent=1 // pred_check
      _
    $region3: #{tpu_custom_call.1} parent=1 // pred_check_branch
      %12 = sbr.rel (0) target = $region5
    $region4: #{tpu_custom_call.1} parent=1 // pred_region
      %14 = vsyncadd [#allocation3], 0
      %s16 = sshll.u32 %s0, 4
      %s17 = int_to_ptr.hbm [resolvable:$true] %s16
      %s18 = sshll.u32 [#allocation2], 4
      %s19 = int_to_ptr.vmem [resolvable:$true] %s18
      %21 = dma.hbm_to_vmem [thread:$0]  %s17, 16, %s19, [#allocation3]
    $region5: #{tpu_custom_call.1} parent=1 // pred_fallthru
      _
    // Predicated region
    $region6: #{tpu_custom_call.1} parent=1 // pred_check
      _
    $region7: #{tpu_custom_call.1} parent=1 // pred_check_branch
      %23 = sbr.rel (0) target = $region9
    $region8: #{tpu_custom_call.1} parent=1 // pred_region
      %25 = vsyncadd [#allocation6], 0
      %s27 = sshll.u32 %s1, 4
      %s28 = int_to_ptr.hbm [resolvable:$true] %s27
      %s29 = sshll.u32 [#allocation5], 4
      %s30 = int_to_ptr.vmem [resolvable:$true] %s29
      %32 = dma.hbm_to_vmem [thread:$0]  %s28, 32, %s30, [#allocation6]
    $region9: #{tpu_custom_call.1} parent=1 // pred_fallthru
      _
    // Predicated region
    $region10: #{tpu_custom_call.1} parent=1 // pred_check
      _
    $region11: #{tpu_custom_call.1} parent=1 // pred_check_branch
      %34 = sbr.rel (0) target = $region13
    $region12: #{tpu_custom_call.1} parent=1 // pred_region
      _
    $region13: #{tpu_custom_call.1} parent=1 // pred_fallthru
      _
    // Predicated region
    $region14: #{tpu_custom_call.1} parent=1 // pred_check
      _
    $region15: #{tpu_custom_call.1} parent=1 // pred_check_branch
      %36 = sbr.rel (0) target = $region17
    $region16: #{tpu_custom_call.1} parent=1 // pred_region
      %38 = dma.done [#allocation3], 16
    $region17: #{tpu_custom_call.1} parent=1 // pred_fallthru
      _
    // Predicated region
    $region18: #{tpu_custom_call.1} parent=1 // pred_check
      _
    $region19: #{tpu_custom_call.1} parent=1 // pred_check_branch
      %40 = sbr.rel (0) target = $region21
    $region20: #{tpu_custom_call.1} parent=1 // pred_region
      %42 = dma.done [#allocation6], 32
    $region21: #{tpu_custom_call.1} parent=1 // pred_fallthru
      _
    %v43 = vld [vmem:[#allocation2] sm:$0x1]
    %v44 = vld [vmem:[#allocation5] sm:$0x3]
    %46 = vset.pattern.permute.xlu0 0
    %47 = vperm.xlu0 %46, %v43
    %v48 = vpop.permute.xlu0 %47
    %v50 = vperm.slane %v48, 0
    %v51 = vmul.f32 %v50, %v44
    %52 = vset.pattern.permute.xlu0 1
    %53 = vperm.xlu0 %52, %v43
    %v54 = vpop.permute.xlu0 %53
    %v56 = vperm.slane %v54, 0
    %v57 = vmul.f32 %v56, %v44
    %v59 = vrot.slane %v57, 1
    %v61 = vadd.f32 %v51, %v59
    %v62 = vld [vmem:[%s2] sm:$0x1]
    %v63 = vadd.f32 %v61, %v62
    %vm64 = vcmask 24576
    %65 = vst.msk [vmem:[#allocation7] sm:$0x1] %vm64, %v63
    // Predicated region
    $region22: #{tpu_custom_call.1} parent=1 // pred_check
      _
    $region23: #{tpu_custom_call.1} parent=1 // pred_check_branch
      %67 = sbr.rel (0) target = $region25
    $region24: #{tpu_custom_call.1} parent=1 // pred_region
      %69 = vsyncadd [#allocation4], 0
      %s71 = sshll.u32 [#allocation7], 4
      %s72 = int_to_ptr.vmem [resolvable:$true] %s71
      %s73 = sshll.u32 %s3, 4
      %s74 = int_to_ptr.hbm [resolvable:$true] %s73
      %76 = dma.vmem_to_hbm [thread:$0]  %s72, 16, %s74, [#allocation4]
    $region25: #{tpu_custom_call.1} parent=1 // pred_fallthru
      _
    // Predicated region
    $region26: #{tpu_custom_call.1} parent=1 // pred_check
      _
    $region27: #{tpu_custom_call.1} parent=1 // pred_check_branch
      %78 = sbr.rel (0) target = $region29
    $region28: #{tpu_custom_call.1} parent=1 // pred_region
      %80 = dma.done [#allocation4], 16
    $region29: #{tpu_custom_call.1} parent=1 // pred_fallthru
      _
    %81 = vsyncpa [#allocation3], 1
    %82 = vsyncpa [#allocation6], 1
    %83 = vsyncpa [#allocation4], 1

</llo_original>
